<compile_context>
chip_gen: v5e
topology: v5e:2x2
jax: 0.10.0
libtpu: 0.0.40
codegen_flags: <defaults>
</compile_context>

<pallas_src>
import jax
import jax.numpy as jnp
from jax import lax
from jax.experimental import pallas as pl
from jax.experimental.pallas import tpu as pltpu  # noqa: F401  (TPU backend assumed)

H1 = 24          # fc1 out features
H2 = 8           # fc2 out features
D_IN = 10        # fc1 in features
PARAM_ROWS = 16  # 10 weight rows + 1 bias row, padded to a sublane multiple
PARAM_LANES = 128


def _model_kernel(x1_ref, x2_ref, p_ref, out_ref):
    # Packed parameter slab (static ref slices are cheap at this size):
    #   rows 0:10  -> [ w1t (24 lanes) | W12 (8 lanes) | zeros ]
    #   row  10    -> [ b1  (24 lanes) | B12 (8 lanes) | zeros ]
    w = p_ref[0:D_IN, :]          # [10, 128]
    b = p_ref[D_IN:D_IN + 1, :]   # [1, 128]

    # One MXU pass computes BOTH v1 (lanes 0:24) and v2 (lanes 24:32).
    h = jnp.dot(x1_ref[...], w, preferred_element_type=jnp.float32) + b  # [N1,128]
    v2 = h[:, H1:H1 + H2]                                                # [N1, 8]

    # scores = x2 @ v2.T via transposed contraction (no explicit XLU transpose)
    s = lax.dot_general(x2_ref[...], v2,
                        dimension_numbers=(((1,), (1,)), ((), ())),
                        preferred_element_type=jnp.float32)              # [N2, N1]

    # Numerically stable softmax over the last dim; exact divide for accuracy.
    m = jnp.max(s, axis=-1, keepdims=True)
    e = jnp.exp(s - m)
    p = e / jnp.sum(e, axis=-1, keepdims=True)

    # dropout(p=0) is the identity.
    # Lane-dense store: lanes 0:24 hold p @ v1; lanes 24:128 are discarded
    # by the wrapper (24:32 hold p @ v2, 32:128 are exact zeros).
    out_ref[...] = jnp.dot(p, h, preferred_element_type=jnp.float32)     # [N2,128]


def prepare_params(w1, b1, w2, b2):
    """One-time preprocessing: fold fc1∘fc2 and pack everything into one
    zero-padded, lane-dense f32 slab of shape [PARAM_ROWS, PARAM_LANES]."""
    w1t = jnp.asarray(w1, jnp.float32).T                    # [10, 24]
    w2t = jnp.asarray(w2, jnp.float32).T                    # [24, 8]
    b1r = jnp.asarray(b1, jnp.float32).reshape(1, -1)       # [1, 24]
    b2r = jnp.asarray(b2, jnp.float32).reshape(1, -1)       # [1, 8]
    w12 = w1t @ w2t                                         # [10, 8]
    b12 = b1r @ w2t + b2r                                   # [1, 8]

    slab = jnp.zeros((PARAM_ROWS, PARAM_LANES), jnp.float32)
    slab = slab.at[0:D_IN, 0:H1].set(w1t)
    slab = slab.at[0:D_IN, H1:H1 + H2].set(w12)
    slab = slab.at[D_IN, 0:H1].set(b1r[0])
    slab = slab.at[D_IN, H1:H1 + H2].set(b12[0])
    return slab


def model_forward(x1, x2, param_slab):
    """x1: [N1, 10], x2: [N2, 8], param_slab: [16, 128] -> out: [N2, 24]."""
    N1, d_in = x1.shape
    N2, _ = x2.shape

    full = lambda shape: pl.BlockSpec(shape, lambda: (0,) * len(shape))

    # Advisory cost estimate (trace-time only).
    flops = 2 * (N1 * d_in * PARAM_LANES + N2 * H2 * N1 + N2 * N1 * PARAM_LANES)
    transcendentals = N2 * N1
    bytes_accessed = 4 * (x1.size + x2.size + param_slab.size + N2 * PARAM_LANES)

    out_padded = pl.pallas_call(
        _model_kernel,
        out_shape=jax.ShapeDtypeStruct((N2, PARAM_LANES), jnp.float32),
        in_specs=[
            full((N1, d_in)),
            full((N2, H2)),
            full((PARAM_ROWS, PARAM_LANES)),
        ],
        out_specs=full((N2, PARAM_LANES)),
        cost_estimate=pl.CostEstimate(flops=flops,
                                      transcendentals=transcendentals,
                                      bytes_accessed=bytes_accessed),
    )(x1.astype(jnp.float32), x2.astype(jnp.float32), param_slab)

    return out_padded[:, :H1]


def _reference(x1, x2, w1, b1, w2, b2):
    v1 = x1 @ w1.T + b1
    v2 = v1 @ w2.T + b2
    v3 = x2 @ v2.T
    v4 = jax.nn.softmax(v3, axis=-1)
    return v4 @ v1


if __name__ == "__main__":
    key = jax.random.PRNGKey(0)
    k1, k2, kw1, kb1, kw2, kb2 = jax.random.split(key, 6)

    # Shapes consistent with the forward pass:
    #   fc1 needs x1[..., 10]; x2 must have last dim 8 to multiply v2.T.
    #   (The original script's sample inputs were shape-inconsistent, hence jit_fail.)
    N1, N2 = 8, 16
    x1 = jax.random.normal(k1, (N1, D_IN), jnp.float32)
    x2 = jax.random.normal(k2, (N2, H2), jnp.float32)

    # Deterministic Linear-style init (uniform +/- 1/sqrt(fan_in)), as in torch.nn.Linear.
    w1 = jax.random.uniform(kw1, (H1, D_IN), jnp.float32, -1.0, 1.0) / jnp.sqrt(10.0)
    b1 = jax.random.uniform(kb1, (H1,), jnp.float32, -1.0, 1.0) / jnp.sqrt(10.0)
    w2 = jax.random.uniform(kw2, (H2, H1), jnp.float32, -1.0, 1.0) / jnp.sqrt(24.0)
    b2 = jax.random.uniform(kb2, (H2,), jnp.float32, -1.0, 1.0) / jnp.sqrt(24.0)

    # Hoisted one-time parameter preprocessing (not on the per-call path).
    param_slab = prepare_params(w1, b1, w2, b2)

    out = model_forward(x1, x2, param_slab)
    jax.block_until_ready(out)

    ref = _reference(x1, x2, w1, b1, w2, b2)
    assert out.shape == (N2, H1), out.shape
    err = float(jnp.max(jnp.abs(out - ref)))
    assert jnp.allclose(out, ref, atol=5e-4, rtol=5e-4), err

    print("KERNEL_OK")
</pallas_src>

<mosaic_0001>
module attributes {stable_mosaic.version = 11 : i64} {
  func.func @_model_kernel(%arg0: memref<8x10xf32, #tpu.memory_space<vmem>>, %arg1: memref<16x8xf32, #tpu.memory_space<vmem>>, %arg2: memref<16x128xf32, #tpu.memory_space<vmem>>, %arg3: memref<16x128xf32, #tpu.memory_space<vmem>>) attributes {dimension_semantics = [], scalar_prefetch = 0 : i64, scratch_operands = 0 : i64, tpu.core_type = #tpu.core_type<tc>} {
    %c0 = arith.constant 0 : index
    %c0_0 = arith.constant 0 : index
    %0 = vector.load %arg2[%c0, %c0_0] : memref<16x128xf32, #tpu.memory_space<vmem>>, vector<10x128xf32>
    %c10 = arith.constant 10 : index
    %c0_1 = arith.constant 0 : index
    %1 = vector.load %arg2[%c10, %c0_1] : memref<16x128xf32, #tpu.memory_space<vmem>>, vector<1x128xf32>
    %c0_2 = arith.constant 0 : index
    %c0_3 = arith.constant 0 : index
    %2 = vector.load %arg0[%c0_2, %c0_3] : memref<8x10xf32, #tpu.memory_space<vmem>>, vector<8x10xf32>
    %cst = arith.constant dense<0.000000e+00> : vector<8x128xf32>
    %3 = tpu.matmul %2, %0, %cst {dimension_numbers = #tpu.dot_dimension_numbers<[1], [0], [0], [1], [0, 0, 1, 1], [], []>} : vector<8x10xf32>, vector<10x128xf32>, vector<8x128xf32> -> vector<8x128xf32>
    %4 = vector.broadcast %1 : vector<1x128xf32> to vector<8x128xf32>
    %5 = arith.addf %3, %4 : vector<8x128xf32>
    %6 = vector.extract_strided_slice %5 {offsets = [0, 24], sizes = [8, 8], strides = [1, 1]} : vector<8x128xf32> to vector<8x8xf32>
    %c0_4 = arith.constant 0 : index
    %c0_5 = arith.constant 0 : index
    %7 = vector.load %arg1[%c0_4, %c0_5] : memref<16x8xf32, #tpu.memory_space<vmem>>, vector<16x8xf32>
    %cst_6 = arith.constant dense<0.000000e+00> : vector<16x8xf32>
    %8 = tpu.matmul %7, %6, %cst_6 {dimension_numbers = #tpu.dot_dimension_numbers<[1], [1], [0], [0], [0, 0, 1, 0], [], []>} : vector<16x8xf32>, vector<8x8xf32>, vector<16x8xf32> -> vector<16x8xf32>
    %cst_7 = arith.constant dense<0xFF800000> : vector<16xf32>
    %9 = vector.multi_reduction <maximumf>, %8, %cst_7 [1] : vector<16x8xf32> to vector<16xf32>
    %10 = vector.shape_cast %9 : vector<16xf32> to vector<16x1xf32>
    %11 = vector.broadcast %10 : vector<16x1xf32> to vector<16x8xf32>
    %12 = arith.subf %8, %11 : vector<16x8xf32>
    %13 = math.exp %12 : vector<16x8xf32>
    %cst_8 = arith.constant dense<0.000000e+00> : vector<16xf32>
    %14 = vector.multi_reduction <add>, %13, %cst_8 [1] : vector<16x8xf32> to vector<16xf32>
    %15 = vector.shape_cast %14 : vector<16xf32> to vector<16x1xf32>
    %16 = vector.broadcast %15 : vector<16x1xf32> to vector<16x8xf32>
    %17 = arith.divf %13, %16 : vector<16x8xf32>
    %cst_9 = arith.constant dense<0.000000e+00> : vector<16x128xf32>
    %18 = tpu.matmul %17, %5, %cst_9 {dimension_numbers = #tpu.dot_dimension_numbers<[1], [0], [0], [1], [0, 0, 1, 1], [], []>} : vector<16x8xf32>, vector<8x128xf32>, vector<16x128xf32> -> vector<16x128xf32>
    %c0_10 = arith.constant 0 : index
    %c0_11 = arith.constant 0 : index
    %19 = vector.load %arg3[%c0_10, %c0_11] : memref<16x128xf32, #tpu.memory_space<vmem>>, vector<16x128xf32>
    tpu.vector_store %arg3[%c0_10, %c0_11], %18 {strides = array<i32>} : memref<16x128xf32, #tpu.memory_space<vmem>>, vector<16x128xf32>,
    return
  }
}

</mosaic_0001>

<llo_original>
// kernel: tpu_custom_call.1
$region0: #{tpu_custom_call.1}
  #allocation0 [shape = 'u32[]', space=smem, size = 0x4, offset = 0x4, fixed_abs, tag = 'smem constant byte address 0x4 - core index']
  #allocation1 [shape = 'u32[72,128]{1,0:T(1,128)}', space=vmem, size = 0x9000, scoped, tag = 'internal scratch']
  %s0 = inlined_call_operand.vmem [shape: f32[8,10], index: 0, kind: input, shape index: {}]
  %s1 = inlined_call_operand.vmem [shape: f32[16,8], index: 1, kind: input, shape index: {}]
  %s2 = inlined_call_operand.vmem [shape: f32[16,128], index: 2, kind: input, shape index: {}]
  %s3 = inlined_call_operand.hbm [shape: f32[16,128], index: 3, kind: output, shape index: {}]
  %s4 = sld [smem:[#allocation0]]
  $region22: #{tpu_custom_call.1} parent=0
    _
  %s6 = ssub.s32 1, %s4
  %s7 = scalar_select 0, %s6, %s4
  $region1: #{tpu_custom_call.1} parent=0
    #allocation2 [shape = 'u8[8192]{0}', space=vmem, size = 0x2000, scoped, tag = 'output window, operand 0, single buffered']
    #allocation3 [shape = 's32[1]{0}', space=sflag, size = 0x4, scoped, tag = 'scoped memory for tpu_custom_call.1']
    %8 = vsyncpa [#allocation3], 0
    // Predicated region
    $region2: #{tpu_custom_call.1} parent=1 // pred_check
      _
    $region3: #{tpu_custom_call.1} parent=1 // pred_check_branch
      %10 = sbr.rel (0) target = $region5
    $region4: #{tpu_custom_call.1} parent=1 // pred_region
      _
    $region5: #{tpu_custom_call.1} parent=1 // pred_fallthru
      _
    // Predicated region
    $region6: #{tpu_custom_call.1} parent=1 // pred_check
      _
    $region7: #{tpu_custom_call.1} parent=1 // pred_check_branch
      %12 = sbr.rel (0) target = $region9
    $region8: #{tpu_custom_call.1} parent=1 // pred_region
      _
    $region9: #{tpu_custom_call.1} parent=1 // pred_fallthru
      _
    // Predicated region
    $region10: #{tpu_custom_call.1} parent=1 // pred_check
      _
    $region11: #{tpu_custom_call.1} parent=1 // pred_check_branch
      %14 = sbr.rel (0) target = $region13
    $region12: #{tpu_custom_call.1} parent=1 // pred_region
      _
    $region13: #{tpu_custom_call.1} parent=1 // pred_fallthru
      _
    %v15 = vld [vmem:[%s2] sm:$0xff]
    %v16 = vld [vmem:[%s2 + $0x8] sm:$0x3]
    %v17 = vld [vmem:[%s2 + $0xa] sm:$0x1]
    %v18 = vld [vmem:[%s0] sm:$0xff]
    %v19 = vperm.slane %v17, 0
    %vm20 = vcmask 80896
    %v22 = vsel %vm20, %v18, 0
    %vm24 = vcmask 1041408
    %v26 = vsel %vm24, %v16, 0
    %28 = vmatpush.msra.mxu0 0.0
    %29 = vmatpush.msra.mxu0 0.0
    %30 = vmatpush.msra.mxu0 0.0
    %31 = vmatpush.msra.mxu0 0.0
    %32 = vmatpush.msra.mxu0 0.0
    %33 = vmatpush.msra.mxu0 0.0
    %34 = vmatpush.msra.mxu0 0.0
    %35 = vmatpush.msra.mxu0 0.0
    %36 = vmatpush.msra.mxu0 0.0
    %37 = vmatpush.msra.mxu0 0.0
    %38 = vmatpush.msra.mxu0 0.0
    %39 = vmatpush.msra.mxu0 0.0
    %40 = vmatpush.msra.mxu0 0.0
    %41 = vmatpush.msra.mxu0 0.0
    %42 = vmatpush.msra.mxu0 %v26
    %43 = vmatpush.msra.mxu0 %v15
    %44 = vmatmul.f32.gmra.mxu0 %v22
    %v45 = vpop.f32.mrf.mxu0
    %v46 = vadd.f32 %v19, %v45
    %47 = vdwg.mxu0
    %v48 = vld [vmem:[%s1] sm:$0xff]
    %v49 = vld [vmem:[%s1 + $0x8] sm:$0xff]
    %51 = vrot.lane.b32.xlu0 %v46, 104
    %v52 = vpop.permute.xlu0 %51
    %vm53 = vcmask 64512
    %v55 = vsel %vm53, %v48, 0
    %v58 = vsel %vm53, %v49, 0
    %v60 = vsel %vm53, %v52, 0
    %62 = vmatpush.xpose.msra.mxu0 0.0
    %63 = vmatpush.xpose.msra.mxu0 0.0
    %64 = vmatpush.xpose.msra.mxu0 0.0
    %65 = vmatpush.xpose.msra.mxu0 0.0
    %66 = vmatpush.xpose.msra.mxu0 0.0
    %67 = vmatpush.xpose.msra.mxu0 0.0
    %68 = vmatpush.xpose.msra.mxu0 0.0
    %69 = vmatpush.xpose.msra.mxu0 0.0
    %70 = vmatpush.xpose.msra.mxu0 0.0
    %71 = vmatpush.xpose.msra.mxu0 0.0
    %72 = vmatpush.xpose.msra.mxu0 0.0
    %73 = vmatpush.xpose.msra.mxu0 0.0
    %74 = vmatpush.xpose.msra.mxu0 0.0
    %75 = vmatpush.xpose.msra.mxu0 0.0
    %76 = vmatpush.xpose.msra.mxu0 0.0
    %77 = vmatpush.xpose.msra.mxu0 %v60
    %78 = vmatmul.f32.gmra.mxu0 %v55
    %v79 = vpop.f32.mrf.mxu0
    %v80 = vadd.f32 0.0, %v79
    %81 = vmatmul.f32.gmra.mxu0 %v58
    %v82 = vpop.f32.mrf.mxu0
    %v83 = vadd.f32 0.0, %v82
    %84 = vdwg.mxu0
    %v85 = vsel %vm53, %v80, -inf
    %86 = vmax.xlane.f32.xlu0 %v85
    %v87 = vpop.xlane.xlu0 %86
    %v88 = vsel %vm53, %v83, -inf
    %89 = vmax.xlane.f32.xlu0 %v88
    %v90 = vpop.xlane.xlu0 %89
    %v91 = vsub.f32 %v80, %v87
    %v92 = vsub.f32 %v83, %v90
    %v93 = vmul.f32 %v91, 1.442695
    %v94 = vpow.pop %v93
    %v95 = vmul.f32 %v92, 1.442695
    %v96 = vpow.pop %v95
    %v97 = vsel %vm53, %v94, 0.0
    %98 = vadd.xlane.f32.xlu0 %v97
    %v99 = vpop.xlane.xlu0 %98
    %v100 = vsel %vm53, %v96, 0.0
    %101 = vadd.xlane.f32.xlu0 %v100
    %v102 = vpop.xlane.xlu0 %101
    %v103 = vrcp.pop %v99
    %v104 = vmul.f32 %v99, %v103
    %v105 = vsub.f32 1.0, %v104
    %v106 = vmul.f32 %v103, %v105
    %v107 = vadd.f32 %v103, %v106
    %vm108 = vweird.f32 %v99
    %vm109 = vweird.f32 %v103
    %vm110 = vmor %vm108, %vm109
    %v111 = vsel %vm110, %v103, %v107
    %v112 = vand.u32 2147483647, %v99
    %vm113 = vcmp.eq.f32.partialorder %v112, 8.507059e+37
    %v114 = vand.u32 %v99, 2147483648
    %v115 = vor.u32 1.1754944e-38, %v114
    %v116 = vsel %vm113, %v115, %v111
    %v117 = vmul.f32 %v94, %v116
    %v118 = vrcp.pop %v102
    %v119 = vmul.f32 %v102, %v118
    %v120 = vsub.f32 1.0, %v119
    %v121 = vmul.f32 %v118, %v120
    %v122 = vadd.f32 %v118, %v121
    %vm123 = vweird.f32 %v102
    %vm124 = vweird.f32 %v118
    %vm125 = vmor %vm123, %vm124
    %v126 = vsel %vm125, %v118, %v122
    %v127 = vand.u32 2147483647, %v102
    %vm128 = vcmp.eq.f32.partialorder %v127, 8.507059e+37
    %v129 = vand.u32 %v102, 2147483648
    %v130 = vor.u32 1.1754944e-38, %v129
    %v131 = vsel %vm128, %v130, %v126
    %v132 = vmul.f32 %v96, %v131
    %v134 = vsel %vm53, %v117, 0
    %v137 = vsel %vm53, %v132, 0
    %139 = vmatpush.msra.mxu0 0.0
    %140 = vmatpush.msra.mxu0 0.0
    %141 = vmatpush.msra.mxu0 0.0
    %142 = vmatpush.msra.mxu0 0.0
    %143 = vmatpush.msra.mxu0 0.0
    %144 = vmatpush.msra.mxu0 0.0
    %145 = vmatpush.msra.mxu0 0.0
    %146 = vmatpush.msra.mxu0 0.0
    %147 = vmatpush.msra.mxu0 0.0
    %148 = vmatpush.msra.mxu0 0.0
    %149 = vmatpush.msra.mxu0 0.0
    %150 = vmatpush.msra.mxu0 0.0
    %151 = vmatpush.msra.mxu0 0.0
    %152 = vmatpush.msra.mxu0 0.0
    %153 = vmatpush.msra.mxu0 0.0
    %154 = vmatpush.msra.mxu0 %v46
    %155 = vmatmul.f32.gmra.mxu0 %v134
    %v156 = vpop.f32.mrf.mxu0
    %v157 = vadd.f32 0.0, %v156
    %158 = vmatmul.f32.gmra.mxu0 %v137
    %v159 = vpop.f32.mrf.mxu0
    %v160 = vadd.f32 0.0, %v159
    %161 = vdwg.mxu0
    %162 = vst [vmem:[#allocation2] sm:$0xff] %v157
    %163 = vst [vmem:[#allocation2 + $0x8] sm:$0xff] %v160
    // Predicated region
    $region14: #{tpu_custom_call.1} parent=1 // pred_check
      _
    $region15: #{tpu_custom_call.1} parent=1 // pred_check_branch
      %165 = sbr.rel (0) target = $region17
    $region16: #{tpu_custom_call.1} parent=1 // pred_region
      %167 = vsyncadd [#allocation3], 0
      %s168 = sshll.u32 [#allocation2], 4
      %s169 = int_to_ptr.vmem [resolvable:$true] %s168
      %s170 = sshll.u32 %s3, 4
      %s171 = int_to_ptr.hbm [resolvable:$true] %s170
      %176 = dma.vmem_to_hbm [thread:$0]  %s169, 256, %s171, [#allocation3], 128, 128, 8
    $region17: #{tpu_custom_call.1} parent=1 // pred_fallthru
      _
    // Predicated region
    $region18: #{tpu_custom_call.1} parent=1 // pred_check
      _
    $region19: #{tpu_custom_call.1} parent=1 // pred_check_branch
      %178 = sbr.rel (0) target = $region21
    $region20: #{tpu_custom_call.1} parent=1 // pred_region
      %180 = dma.done [#allocation3], 256
    $region21: #{tpu_custom_call.1} parent=1 // pred_fallthru
      _
    %181 = vsyncpa [#allocation3], 1

</llo_original>
